<compile_context>
chip_gen: v7x
topology: tpu7x:2x2x1
jax: 0.10.0
libtpu: 0.0.40
codegen_flags: <defaults>
</compile_context>

<pallas_src>
import functools

import jax
import jax.numpy as jnp
from jax import lax
from jax.experimental import pallas as pl
from jax.experimental.pallas import tpu as pltpu

_NEG_BIG = -1e30
_SLOPE = 0.2   # LeakyReLU negative slope (cogdl GATConv default)


# ----------------------------------------------------------------------------
# Kernel A: per-relation feature projection  h[r] = x @ W[r]   (bf16 out)
# ----------------------------------------------------------------------------
def _proj_kernel(x_ref, w_ref, h_ref):
    x = x_ref[...].astype(jnp.bfloat16)
    w = w_ref[0].astype(jnp.bfloat16)
    h_ref[0] = jnp.dot(x, w,
                       preferred_element_type=jnp.float32).astype(jnp.bfloat16)


# ----------------------------------------------------------------------------
# Kernel B: fused masked multi-head GAT (online softmax over neighbour tiles)
#           + semantic AttentionLayer accumulated over the relation grid axis.
# ----------------------------------------------------------------------------
def _han_fused_kernel(hi_ref, hj_ref, al_ref, art_ref, mask_ref,
                      attw_ref, attb_ref, y_ref,
                      m_ref, l_ref, acc_ref, *, heads, dh):
    r = pl.program_id(1)
    j = pl.program_id(2)
    nj = pl.num_programs(2)

    # Fused semantic-attention output: accumulated across relations.
    @pl.when(jnp.logical_and(r == 0, j == 0))
    def _():
        y_ref[...] = jnp.zeros_like(y_ref)

    # Online-softmax state: reset at the start of every (i_tile, relation).
    @pl.when(j == 0)
    def _():
        m_ref[...] = jnp.full_like(m_ref, _NEG_BIG)
        l_ref[...] = jnp.zeros_like(l_ref)
        acc_ref[...] = jnp.zeros_like(acc_ref)

    h_i = hi_ref[0]                                     # [ti, C] bf16
    h_j = hj_ref[0]                                     # [tj, C] bf16
    al = al_ref[0].astype(jnp.bfloat16)                 # [C, H]
    ar_t = art_ref[0].astype(jnp.bfloat16)              # [H, C]

    # Per-node attention logits for ALL heads: two small MXU matmuls
    # (block-diagonal head matrices), no per-head cross-lane reductions.
    el = jnp.dot(h_i, al, preferred_element_type=jnp.float32)        # [ti, H]
    er_t = lax.dot_general(ar_t, h_j, (((1,), (1,)), ((), ())),
                           preferred_element_type=jnp.float32)       # [H, tj]

    # Additive mask bias computed ONCE per (i, r, j) tile (hoisted out of the
    # head loop); mask arrives as bf16 to halve the dominant HBM stream.
    bias = jnp.where(mask_ref[0] > 0,
                     jnp.float32(0.0), jnp.float32(_NEG_BIG))         # [ti, tj]

    m_old = m_ref[...]                                  # [ti, H]
    l_old = l_ref[...]                                  # [ti, H]

    # NOTE: heads (=8) is small & static; kept as an unrolled Python loop so
    # per-head results can be packed into single lane-dense [ti, C] updates.
    m_cols, l_cols, scale_cols, contribs = [], [], [], []
    for hd in range(heads):
        s = el[:, hd:hd + 1] + er_t[hd:hd + 1, :]       # [ti, tj]
        s = jnp.where(s > 0, s, _SLOPE * s) + bias      # LeakyReLU + mask
        m_prev = m_old[:, hd:hd + 1]
        m_new = jnp.maximum(m_prev, jnp.max(s, axis=-1, keepdims=True))
        alpha = jnp.exp(m_prev - m_new)                 # [ti, 1]
        p = jnp.exp(s - m_new)                          # [ti, tj]
        m_cols.append(m_new)
        l_cols.append(alpha * l_old[:, hd:hd + 1]
                      + jnp.sum(p, axis=-1, keepdims=True))
        scale_cols.append(jnp.broadcast_to(alpha, (alpha.shape[0], dh)))
        # dh=4-wide matmul: MXU under-utilised by construction; the kernel is
        # VPU/softmax-bound, so this is the accepted trade-off.
        contribs.append(jnp.dot(p.astype(jnp.bfloat16),
                                h_j[:, hd * dh:(hd + 1) * dh],
                                preferred_element_type=jnp.float32))

    m_ref[...] = jnp.concatenate(m_cols, axis=1)
    l_ref[...] = jnp.concatenate(l_cols, axis=1)
    # Single lane-dense read-modify-write of the [ti, C] accumulator.
    acc_ref[...] = (jnp.concatenate(scale_cols, axis=1) * acc_ref[...]
                    + jnp.concatenate(contribs, axis=1))

    # Last neighbour tile: finalize this relation's GAT output and fold it into
    # the semantic attention (AttentionLayer fused here: y += (o·w + b) * o).
    @pl.when(j == nj - 1)
    def _():
        inv_l = pl.reciprocal(l_ref[...], approx=True)  # [ti, H] on the EUP
        inv_full = jnp.concatenate(
            [jnp.broadcast_to(inv_l[:, hd:hd + 1], (inv_l.shape[0], dh))
             for hd in range(heads)], axis=1)           # [ti, C]
        o = acc_ref[...] * inv_full                     # [ti, C]
        att = jnp.sum(o * attw_ref[...], axis=-1, keepdims=True) + attb_ref[...]
        y_ref[...] += att * o


# ----------------------------------------------------------------------------
# Wrapper
# ----------------------------------------------------------------------------
def _head_blockdiag(a):
    """[R, H, Dh] -> [R, H*Dh, H] block-diagonal per-head projection matrix."""
    r_edge, heads, dh = a.shape
    eye = jnp.eye(heads, dtype=a.dtype)
    return (a[:, :, :, None] * eye[:, None, :]).reshape(r_edge, heads * dh, heads)


def han_layer_forward(x, adj_mask, gat_w, gat_al, gat_ar, att_w, att_b,
                      *, ti=256, tj=512):
    """HANLayer forward.  adj_mask[r, i, j] = 1 iff node i receives from j."""
    n, f_in = x.shape
    r_edge, _, c = gat_w.shape
    heads, dh = gat_al.shape[1], gat_al.shape[2]
    assert heads * dh == c
    ti = min(ti, n)
    tj = min(tj, n)
    assert n % ti == 0 and n % tj == 0, "N must be divisible by the tile sizes"

    # Tiny one-time parameter preprocessing (not per-node data).
    al_bd = _head_blockdiag(gat_al)                          # [R, C, H]
    ar_bd_t = jnp.swapaxes(_head_blockdiag(gat_ar), 1, 2)    # [R, H, C]

    # --- Kernel A: per-relation projection, bf16 intermediate ---------------
    h = pl.pallas_call(
        _proj_kernel,
        out_shape=jax.ShapeDtypeStruct((r_edge, n, c), jnp.bfloat16),
        grid=(r_edge, n // ti),
        in_specs=[
            pl.BlockSpec((ti, f_in), lambda r, i: (i, 0)),
            pl.BlockSpec((1, f_in, c), lambda r, i: (r, 0, 0)),
        ],
        out_specs=pl.BlockSpec((1, ti, c), lambda r, i: (r, i, 0)),
        compiler_params=pltpu.CompilerParams(
            dimension_semantics=("parallel", "parallel")),
    )(x, gat_w)

    # --- Kernel B: fused masked GAT + semantic attention ---------------------
    kernel = functools.partial(_han_fused_kernel, heads=heads, dh=dh)
    y = pl.pallas_call(
        kernel,
        out_shape=jax.ShapeDtypeStruct((n, c), jnp.float32),
        grid=(n // ti, r_edge, n // tj),        # neighbour axis j innermost
        in_specs=[
            pl.BlockSpec((1, ti, c), lambda i, r, j: (r, i, 0)),      # h_i
            pl.BlockSpec((1, tj, c), lambda i, r, j: (r, j, 0)),      # h_j
            pl.BlockSpec((1, c, heads), lambda i, r, j: (r, 0, 0)),   # a_l blockdiag
            pl.BlockSpec((1, heads, c), lambda i, r, j: (r, 0, 0)),   # a_r blockdiag^T
            pl.BlockSpec((1, ti, tj), lambda i, r, j: (r, i, j)),     # mask tile
            pl.BlockSpec((1, c), lambda i, r, j: (0, 0)),             # att_w
            pl.BlockSpec((1, 1), lambda i, r, j: (0, 0)),             # att_b
        ],
        out_specs=pl.BlockSpec((ti, c), lambda i, r, j: (i, 0)),
        scratch_shapes=[
            pltpu.VMEM((ti, heads), jnp.float32),   # running max  m
            pltpu.VMEM((ti, heads), jnp.float32),   # running sum  l
            pltpu.VMEM((ti, c), jnp.float32),       # weighted-sum accumulator
        ],
        compiler_params=pltpu.CompilerParams(
            # i tiles independent -> megacore-parallel on v7x; relation and
            # neighbour axes accumulate into resident blocks -> arbitrary.
            dimension_semantics=("parallel", "arbitrary", "arbitrary"),
            # tiles chosen so double-buffered mask/h tiles + f32 score temps
            # fit comfortably inside v7x's smaller (64 MiB physical) VMEM.
            vmem_limit_bytes=32 * 1024 * 1024),
    )(h, h, al_bd, ar_bd_t, adj_mask, att_w, att_b)
    return y


# ----------------------------------------------------------------------------
# Pure-JAX reference (same math, dense adjacency, f32)
# ----------------------------------------------------------------------------
def han_layer_reference(x, adj_mask, gat_w, gat_al, gat_ar, att_w, att_b):
    n = x.shape[0]
    r_edge, _, c = gat_w.shape
    heads, dh = gat_al.shape[1], gat_al.shape[2]
    outs = []
    for r in range(r_edge):
        h = x @ gat_w[r]                                   # [N, H*Dh]
        hr = h.reshape(n, heads, dh)
        el = (hr * gat_al[r][None]).sum(-1)                # [N, H]
        er = (hr * gat_ar[r][None]).sum(-1)
        s = el[:, None, :] + er[None, :, :]                # [N, N, H] score(i<-j)
        s = jnp.where(s > 0, s, _SLOPE * s)
        s = jnp.where(adj_mask[r][:, :, None] > 0, s, _NEG_BIG)
        p = jax.nn.softmax(s, axis=1)
        o = jnp.einsum('ijh,jhd->ihd', p, hr).reshape(n, c)
        outs.append(o)
    stk = jnp.stack(outs, axis=1)                          # [N, R, C]
    att = (stk @ att_w.T) + att_b                          # [N, R, 1]
    att = att.reshape(n, 1, r_edge)                        # view(-1, 1, R)
    return jnp.matmul(att, stk).squeeze(1)                 # [N, C]


if __name__ == "__main__":
    # Small synthetic config: R=2 relations, w_in=16, w_out=32 (8 heads x 4),
    # N=256 nodes, 128x128 tiles so the multi-tile online-softmax / relation
    # accumulation paths are actually exercised.
    N, F_IN, W_OUT, R, HEADS = 256, 16, 32, 2, 8
    DH = W_OUT // HEADS
    TI, TJ = 128, 128

    key = jax.random.PRNGKey(0)
    k_x, k_w, k_al, k_ar, k_aw, k_e = jax.random.split(key, 6)

    x = jax.random.normal(k_x, (N, F_IN), dtype=jnp.float32)
    gat_w = 0.1 * jax.random.normal(k_w, (R, F_IN, W_OUT), dtype=jnp.float32)
    gat_al = 0.1 * jax.random.normal(k_al, (R, HEADS, DH), dtype=jnp.float32)
    gat_ar = 0.1 * jax.random.normal(k_ar, (R, HEADS, DH), dtype=jnp.float32)
    att_w = 0.1 * jax.random.normal(k_aw, (1, W_OUT), dtype=jnp.float32)
    att_b = jnp.full((1, 1), 0.01, dtype=jnp.float32)

    # Dense adjacency masks (one per edge type) from random edge lists, with
    # self-loops so every node has >=1 neighbour (masked-softmax invariant).
    E = 2048
    masks = []
    for r in range(R):
        k_e, ks, kd = jax.random.split(k_e, 3)
        src = jax.random.randint(ks, (E,), 0, N)
        dst = jax.random.randint(kd, (E,), 0, N)
        m = jnp.zeros((N, N), jnp.float32).at[dst, src].set(1.0)
        m = jnp.maximum(m, jnp.eye(N, dtype=jnp.float32))
        masks.append(m)
    adj_mask_f32 = jnp.stack(masks, axis=0)                # [R, N, N]
    adj_mask = adj_mask_f32.astype(jnp.bfloat16)           # compressed HBM stream

    y = jax.block_until_ready(
        han_layer_forward(x, adj_mask, gat_w, gat_al, gat_ar, att_w, att_b,
                          ti=TI, tj=TJ))

    y_ref = han_layer_reference(x, adj_mask_f32, gat_w, gat_al, gat_ar,
                                att_w, att_b)
    assert y.shape == (N, W_OUT)
    max_err = float(jnp.max(jnp.abs(y - y_ref)))
    # bf16 MXU feeds + approx reciprocal -> loosened tolerance vs f32 reference
    assert jnp.allclose(y, y_ref, atol=5e-2, rtol=5e-2), \
        f"mismatch vs reference (max abs err {max_err})"
    print("KERNEL_OK")
</pallas_src>

<mosaic_0001>
module attributes {stable_mosaic.version = 11 : i64} {
  func.func @_proj_kernel(%arg0: i32, %arg1: i32, %arg2: memref<128x16xf32, #tpu.memory_space<vmem>>, %arg3: memref<1x16x32xf32, #tpu.memory_space<vmem>>, %arg4: memref<1x128x32xbf16, #tpu.memory_space<vmem>>) attributes {dimension_semantics = [#tpu.dimension_semantics<parallel>, #tpu.dimension_semantics<parallel>], iteration_bounds = array<i64: 2, 2>, scalar_prefetch = 0 : i64, scratch_operands = 0 : i64, tpu.core_type = #tpu.core_type<tc>, window_params = [{transform_indices = @transform_0, window_bounds = array<i64: 128, 16>}, {transform_indices = @transform_1, window_bounds = array<i64: 1, 16, 32>}, {transform_indices = @transform_2, window_bounds = array<i64: 1, 128, 32>}]} {
    %c0 = arith.constant 0 : index
    %c0_0 = arith.constant 0 : index
    %0 = vector.load %arg2[%c0, %c0_0] : memref<128x16xf32, #tpu.memory_space<vmem>>, vector<128x16xf32>
    %1 = arith.truncf %0 : vector<128x16xf32> to vector<128x16xbf16>
    %c0_1 = arith.constant 0 : index
    %c0_2 = arith.constant 0 : index
    %c0_3 = arith.constant 0 : index
    %2 = vector.load %arg3[%c0_1, %c0_2, %c0_3] : memref<1x16x32xf32, #tpu.memory_space<vmem>>, vector<1x16x32xf32>
    %3 = vector.shape_cast %2 : vector<1x16x32xf32> to vector<16x32xf32>
    %4 = arith.truncf %3 : vector<16x32xf32> to vector<16x32xbf16>
    %cst = arith.constant dense<0.000000e+00> : vector<128x32xf32>
    %5 = tpu.matmul %1, %4, %cst {dimension_numbers = #tpu.dot_dimension_numbers<[1], [0], [0], [1], [0, 0, 1, 1], [], []>} : vector<128x16xbf16>, vector<16x32xbf16>, vector<128x32xf32> -> vector<128x32xf32>
    %6 = arith.truncf %5 : vector<128x32xf32> to vector<128x32xbf16>
    %c0_4 = arith.constant 0 : index
    %c0_5 = arith.constant 0 : index
    %c0_6 = arith.constant 0 : index
    %7 = vector.load %arg4[%c0_4, %c0_5, %c0_6] : memref<1x128x32xbf16, #tpu.memory_space<vmem>>, vector<1x128x32xbf16>
    %8 = vector.shape_cast %7 : vector<1x128x32xbf16> to vector<128x32xbf16>
    %9 = vector.shape_cast %6 : vector<128x32xbf16> to vector<1x128x32xbf16>
    tpu.vector_store %arg4[%c0_4, %c0_5, %c0_6], %9 {strides = array<i32>} : memref<1x128x32xbf16, #tpu.memory_space<vmem>>, vector<1x128x32xbf16>,
    return
  }
  func.func @transform_0(%arg0: i32, %arg1: i32) -> (i32, i32) {
    %c0_i32 = arith.constant 0 : i32
    %c0_i32_0 = arith.constant 0 : i32
    return %arg1, %c0_i32 : i32, i32
  }
  func.func @transform_1(%arg0: i32, %arg1: i32) -> (i32, i32, i32) {
    %c0_i32 = arith.constant 0 : i32
    %c0_i32_0 = arith.constant 0 : i32
    %c0_i32_1 = arith.constant 0 : i32
    return %arg0, %c0_i32, %c0_i32_0 : i32, i32, i32
  }
  func.func @transform_2(%arg0: i32, %arg1: i32) -> (i32, i32, i32) {
    %c0_i32 = arith.constant 0 : i32
    %c0_i32_0 = arith.constant 0 : i32
    return %arg0, %arg1, %c0_i32 : i32, i32, i32
  }
}

</mosaic_0001>

<llo_original>
// kernel: tpu_custom_call.1
$region0: #{tpu_custom_call.1}
  #allocation0 [shape = 'u32[]', space=smem, size = 0x4, offset = 0x4, fixed_abs, tag = 'smem constant byte address 0x4 - core index']
  #allocation1 [shape = 'u32[144,128]{1,0:T(1,128)}', space=vmem, size = 0x12000, scoped, tag = 'internal scratch']
  %s0 = inlined_call_operand.vmem [shape: f32[256,16], index: 0, kind: input, shape index: {}]
  %s1 = inlined_call_operand.vmem [shape: f32[2,16,32], index: 1, kind: input, shape index: {}]
  %s2 = inlined_call_operand.vmem [shape: bf16[2,256,32], index: 2, kind: output, shape index: {}]
  %s3 = sld [smem:[#allocation0]]
  $region41: #{tpu_custom_call.1} parent=0
    _
  %s5 = ssub.s32 1, %s3
  %s6 = scalar_select 0, %s5, %s3
  loop: start=0, step=1, limit=6
  $region2: #{tpu_custom_call.1} parent=0 // loop_pre_header
    _
  $region3: #{tpu_custom_call.1} parent=0 // loop_header
    %s8 = sphi 0, %s12
    %p9 = scmp.ge.s32.totalorder %s8, 6
    %s15 = sphi 0, %s27
    %s16 = sphi 0, %s23
    %s17 = sphi 0, %s15
    %s18 = sphi 0, %s16
    %s19 = sphi 0, %s17
    %s20 = sphi 0, %s18
    %s30 = sphi 0, %s32
    %s33 = sphi 0, %s30
    %s34 = sphi 0, %s33
    %s50 = sphi 0, %s34
    %s56 = sphi 0, %s58
    %s59 = sphi 0, %s56
    %s60 = sphi 0, %s59
    %s76 = sphi 0, %s60
    %s84 = sphi 0, %s86
    %s87 = sphi 0, %s84
    %s88 = sphi 0, %s87
    %s104 = sphi 0, %s88
  $region4: #{tpu_custom_call.1} parent=0 // loop_header_branch
    %11 = sbr.rel (%p9) target = $region8
  $region5: #{tpu_custom_call.1} parent=0 // loop_body
    %s13 = ssub.s32 %s8, 1
    %s14 = ssub.s32 %s8, 2
    %s21 = sadd.s32 1, %s16
    %p22 = scmp.ge.s32.totalorder %s21, 2
    %s23 = scalar_select %p22, 0, %s21
    %s24 = sadd.s32 1, %s15
    %s25 = scalar_select %p22, %s24, %s15
    %p26 = scmp.ge.s32.totalorder %s25, 2
    %s27 = scalar_select %p26, 0, %s25
    %s28 = ssub.s32 %s16, %s23
    %p29 = scmp.eq.s32.totalorder %s28, 0
    %s31 = sadd.s32 %s30, 1
    %s32 = scalar_select %p29, %s30, %s31
    %p35 = pneg %p29
    %p36 = scmp.eq.s32.totalorder %s8, 3
    %p37 = por %p35, %p36
    %p38 = scmp.ne.s32.totalorder %s30, %s33
    %p39 = scmp.eq.s32.totalorder %s8, 0
    %p40 = por %p38, %p39
    %p41 = scmp.ne.s32.totalorder %s30, %s33
    %p42 = scmp.eq.s32.totalorder %s13, 3
    %p43 = por %p41, %p42
    %p44 = scmp.ne.s32.totalorder %s33, %s34
    %p45 = scmp.eq.s32.totalorder %s13, 0
    %p46 = por %p44, %p45
    %p47 = scmp.ne.s32.totalorder %s33, %s34
    %p48 = scmp.eq.s32.totalorder %s14, 3
    %p49 = por %p47, %p48
    %p51 = scmp.ne.s32.totalorder %s34, %s50
    %p52 = scmp.eq.s32.totalorder %s14, 0
    %p53 = por %p51, %p52
    %s54 = ssub.s32 %s15, %s27
    %p55 = scmp.eq.s32.totalorder %s54, 0
    %s57 = sadd.s32 %s56, 1
    %s58 = scalar_select %p55, %s56, %s57
    %p61 = pneg %p55
    %p62 = scmp.eq.s32.totalorder %s8, 3
    %p63 = por %p61, %p62
    %p64 = scmp.ne.s32.totalorder %s56, %s59
    %p65 = scmp.eq.s32.totalorder %s8, 0
    %p66 = por %p64, %p65
    %p67 = scmp.ne.s32.totalorder %s56, %s59
    %p68 = scmp.eq.s32.totalorder %s13, 3
    %p69 = por %p67, %p68
    %p70 = scmp.ne.s32.totalorder %s59, %s60
    %p71 = scmp.eq.s32.totalorder %s13, 0
    %p72 = por %p70, %p71
    %p73 = scmp.ne.s32.totalorder %s59, %s60
    %p74 = scmp.eq.s32.totalorder %s14, 3
    %p75 = por %p73, %p74
    %p77 = scmp.ne.s32.totalorder %s60, %s76
    %p78 = scmp.eq.s32.totalorder %s14, 0
    %p79 = por %p77, %p78
    %s80 = ssub.s32 %s15, %s27
    %s81 = ssub.s32 %s16, %s23
    %s82 = sor.u32 %s80, %s81
    %p83 = scmp.eq.s32.totalorder %s82, 0
    %s85 = sadd.s32 %s84, 1
    %s86 = scalar_select %p83, %s84, %s85
    %p89 = pneg %p83
    %p90 = scmp.eq.s32.totalorder %s8, 3
    %p91 = por %p89, %p90
    %p92 = scmp.ne.s32.totalorder %s84, %s87
    %p93 = scmp.eq.s32.totalorder %s8, 0
    %p94 = por %p92, %p93
    %p95 = scmp.ne.s32.totalorder %s84, %s87
    %p96 = scmp.eq.s32.totalorder %s13, 3
    %p97 = por %p95, %p96
    %p98 = scmp.ne.s32.totalorder %s87, %s88
    %p99 = scmp.eq.s32.totalorder %s13, 0
    %p100 = por %p98, %p99
    %p101 = scmp.ne.s32.totalorder %s87, %s88
    %p102 = scmp.eq.s32.totalorder %s14, 3
    %p103 = por %p101, %p102
    %p105 = scmp.ne.s32.totalorder %s88, %s104
    %p106 = scmp.eq.s32.totalorder %s14, 0
    %p107 = por %p105, %p106
    %p108 = scmp.le.s32.totalorder 1, %s8
    %p109 = scmp.lt.s32.totalorder %s8, 5
    %p110 = pnand %p108, %p109
    %p111 = pneg %p110
    // Predicated region
    $region9: #{tpu_custom_call.1} parent=5 // pred_check
      _
    $region10: #{tpu_custom_call.1} parent=5 // pred_check_branch
      %113 = sbr.rel (%p110) target = $region12
    $region11: #{tpu_custom_call.1} parent=5 // pred_region
      %s114 = ssub.s32 %s8, 1
    $region12: #{tpu_custom_call.1} parent=5 // pred_fallthru
      _
    %p115 = scmp.lt.s32.totalorder %s8, 4
    // Predicated region
    $region13: #{tpu_custom_call.1} parent=5 // pred_check
      %p116 = pneg %p115
    $region14: #{tpu_custom_call.1} parent=5 // pred_check_branch
      %118 = sbr.rel (%p116) target = $region16
    $region15: #{tpu_custom_call.1} parent=5 // pred_region
      // Predicated region
      $region17: #{tpu_custom_call.1} parent=15 // pred_check
        %p119 = pneg %p40
      $region18: #{tpu_custom_call.1} parent=15 // pred_check_branch
        %121 = sbr.rel (%p119) target = $region20
      $region19: #{tpu_custom_call.1} parent=15 // pred_region
        %s122 = smul.u32 16, %s16
        %p123 = scmp.lt.s32.totalorder %s122, 31
        %s124 = scalar_select %p123, %s122, 31
        %s125 = smul.addr %s124, 8
        %s126 = scalar_lea.vmem %s0, %s125
        %s127 = smul.u32 16, %s16
      $region20: #{tpu_custom_call.1} parent=15 // pred_fallthru
        _
      // Predicated region
      $region21: #{tpu_custom_call.1} parent=15 // pred_check
        %p128 = pneg %p66
      $region22: #{tpu_custom_call.1} parent=15 // pred_check_branch
        %130 = sbr.rel (%p128) target = $region24
      $region23: #{tpu_custom_call.1} parent=15 // pred_region
        %p131 = scmp.lt.s32.totalorder %s15, 1
        %s132 = scalar_select %p131, %s15, 1
        %s133 = smul.addr %s132, 2
        %s134 = smul.addr %s133, 8
        %s135 = scalar_lea.vmem %s1, %s134
      $region24: #{tpu_custom_call.1} parent=15 // pred_fallthru
        _
    $region16: #{tpu_custom_call.1} parent=5 // pred_fallthru
      _
    %p136 = scmp.le.s32.totalorder 1, %s8
    %p137 = scmp.lt.s32.totalorder %s8, 5
    %p138 = pnand %p136, %p137
    %p139 = pneg %p138
    // Predicated region
    $region25: #{tpu_custom_call.1} parent=5 // pred_check
      _
    $region26: #{tpu_custom_call.1} parent=5 // pred_check_branch
      %141 = sbr.rel (%p138) target = $region28
    $region27: #{tpu_custom_call.1} parent=5 // pred_region
      %s142 = ssub.s32 %s8, 1
      %s143 = smul.u32 16, %s18
      %p144 = scmp.lt.s32.totalorder %s143, 31
      %s145 = scalar_select %p144, %s143, 31
      %s146 = smul.addr %s145, 8
      %s147 = scalar_lea.vmem %s0, %s146
      %p148 = pneg %p46
      %p149 = pneg %p43
      %p150 = scmp.lt.s32.totalorder %s17, 1
      %s151 = scalar_select %p150, %s17, 1
      %s152 = smul.addr %s151, 2
      %s153 = smul.addr %s152, 8
      %s154 = scalar_lea.vmem %s1, %s153
      %p155 = pneg %p72
      %p156 = pneg %p69
      %p157 = pneg %p100
      %p158 = pneg %p97
      %s159 = smul.u32 16, %s18
      %p160 = scmp.lt.s32.totalorder %s17, 1
      %s161 = scalar_select %p160, %s17, 1
      %p162 = scmp.lt.s32.totalorder %s159, 31
      %s163 = scalar_select %p162, %s159, 31
      %s164 = smul.addr %s161, 32
      %s165 = sadd.s32 %s163, %s164
      %s166 = smul.addr %s165, 4
      %s167 = scalar_lea.vmem %s2, %s166
      %s168 = smul.u32 16, %s18
      %p169 = scmp.lt.s32.totalorder %s168, 31
      %s170 = scalar_select %p169, %s168, 31
      %s171 = smul.addr %s170, 8
      %s172 = scalar_lea.vmem %s0, %s171
      %s173 = smul.u32 16, %s18
      %p174 = scmp.lt.s32.totalorder %s17, 1
      %s175 = scalar_select %p174, %s17, 1
      %s176 = smul.addr %s175, 2
      %s177 = smul.addr %s176, 8
      %s178 = scalar_lea.vmem %s1, %s177
      %s179 = smul.u32 16, %s18
      %p180 = scmp.lt.s32.totalorder %s17, 1
      %s181 = scalar_select %p180, %s17, 1
      %p182 = scmp.lt.s32.totalorder %s179, 31
      %s183 = scalar_select %p182, %s179, 31
      %s184 = smul.addr %s181, 32
      %s185 = sadd.s32 %s183, %s184
      %s186 = smul.addr %s185, 4
      %s187 = scalar_lea.vmem %s2, %s186
      %s188 = smul.u32 16, %s18
      %v190 = vld [vmem:[%s172] sm:$0xff]
      %v191 = vld [vmem:[%s172 + $0x8] sm:$0xff]
      %v192 = vld [vmem:[%s172 + $0x10] sm:$0xff]
      %v193 = vld [vmem:[%s172 + $0x18] sm:$0xff]
      %v194 = vld [vmem:[%s172 + $0x20] sm:$0xff]
      %v195 = vld [vmem:[%s172 + $0x28] sm:$0xff]
      %v196 = vld [vmem:[%s172 + $0x30] sm:$0xff]
      %v197 = vld [vmem:[%s172 + $0x38] sm:$0xff]
      %v198 = vld [vmem:[%s172 + $0x40] sm:$0xff]
      %v199 = vld [vmem:[%s172 + $0x48] sm:$0xff]
      %v200 = vld [vmem:[%s172 + $0x50] sm:$0xff]
      %v201 = vld [vmem:[%s172 + $0x58] sm:$0xff]
      %v202 = vld [vmem:[%s172 + $0x60] sm:$0xff]
      %v203 = vld [vmem:[%s172 + $0x68] sm:$0xff]
      %v204 = vld [vmem:[%s172 + $0x70] sm:$0xff]
      %v205 = vld [vmem:[%s172 + $0x78] sm:$0xff]
      %v206 = vpack.c.bf16 %v191, %v190
      %v207 = vpack.c.bf16 %v193, %v192
      %v208 = vpack.c.bf16 %v195, %v194
      %v209 = vpack.c.bf16 %v197, %v196
      %v210 = vpack.c.bf16 %v199, %v198
      %v211 = vpack.c.bf16 %v201, %v200
      %v212 = vpack.c.bf16 %v203, %v202
      %v213 = vpack.c.bf16 %v205, %v204
      %v214 = vld [vmem:[%s178] sm:$0xff]
      %v215 = vld [vmem:[%s178 + $0x8] sm:$0xff]
      %v216 = vpack.c.bf16 %v215, %v214
      %vm217 = vcmask 130048
      %v219 = vsel %vm217, %v206, 0
      %v222 = vsel %vm217, %v207, 0
      %v225 = vsel %vm217, %v208, 0
      %v228 = vsel %vm217, %v209, 0
      %v231 = vsel %vm217, %v210, 0
      %v234 = vsel %vm217, %v211, 0
      %v237 = vsel %vm217, %v212, 0
      %v240 = vsel %vm217, %v213, 0
      %242 = vmatprep.subr.bf16.mxu0 0
      %243 = vmatpush1.bf16.msra.mxu0 %v216
      %244 = vmatprep.subr.bf16.mxu0 0
      %245 = vmatpush1.bf16.msra.mxu0 0
      %246 = vmatprep.subr.bf16.mxu0 0
      %247 = vmatpush1.bf16.msra.mxu0 0
      %248 = vmatprep.subr.bf16.mxu0 0
      %249 = vmatpush1.bf16.msra.mxu0 0
      %250 = vmatprep.subr.bf16.mxu0 0
      %251 = vmatpush1.bf16.msra.mxu0 0
      %252 = vmatprep.subr.bf16.mxu0 0
      %253 = vmatpush1.bf16.msra.mxu0 0
      %254 = vmatprep.subr.bf16.mxu0 0
      %255 = vmatpush1.bf16.msra.mxu0 0
      %256 = vmatprep.subr.bf16.mxu0 0
      %257 = vmatpush1.bf16.msra.mxu0 0
      %258 = vmatprep.subr.bf16.mxu0 0
      %259 = vmatpush1.bf16.msra.mxu0 0
      %260 = vmatprep.subr.bf16.mxu0 0
      %261 = vmatpush1.bf16.msra.mxu0 0
      %262 = vmatprep.subr.bf16.mxu0 0
      %263 = vmatpush1.bf16.msra.mxu0 0
      %264 = vmatprep.subr.bf16.mxu0 0
      %265 = vmatpush1.bf16.msra.mxu0 0
      %266 = vmatprep.subr.bf16.mxu0 0
      %267 = vmatpush1.bf16.msra.mxu0 0
      %268 = vmatprep.subr.bf16.mxu0 0
      %269 = vmatpush1.bf16.msra.mxu0 0
      %270 = vmatprep.subr.bf16.mxu0 0
      %271 = vmatpush1.bf16.msra.mxu0 0
      %272 = vmatprep.subr.bf16.mxu0 0
      %273 = vmatpush1.bf16.msra.mxu0 0
      %274 = vmatprep.mubr.bf16.mxu0 0
      %275 = vmatmul.mubr.bf16.gmra.mrb[0].mxu0 %v219
      %v276 = vpop.f32.mrb[0].mxu0
      %v277 = vadd.f32 0.0, %v276
      %v278 = vpop.f32.mrb[0].mxu0
      %v279 = vpop.f32.mrb[0].mxu0
      %v280 = vadd.f32 0.0, %v279
      %v281 = vpop.f32.mrb[0].mxu0
      %282 = vmatprep.mubr.bf16.mxu0 0
      %283 = vmatmul.mubr.bf16.gmra.mrb[0].mxu0 %v222
      %v284 = vpop.f32.mrb[0].mxu0
      %v285 = vadd.f32 0.0, %v284
      %v286 = vpop.f32.mrb[0].mxu0
      %v287 = vpop.f32.mrb[0].mxu0
      %v288 = vadd.f32 0.0, %v287
      %v289 = vpop.f32.mrb[0].mxu0
      %290 = vmatprep.mubr.bf16.mxu0 0
      %291 = vmatmul.mubr.bf16.gmra.mrb[0].mxu0 %v225
      %v292 = vpop.f32.mrb[0].mxu0
      %v293 = vadd.f32 0.0, %v292
      %v294 = vpop.f32.mrb[0].mxu0
      %v295 = vpop.f32.mrb[0].mxu0
      %v296 = vadd.f32 0.0, %v295
      %v297 = vpop.f32.mrb[0].mxu0
      %298 = vmatprep.mubr.bf16.mxu0 0
      %299 = vmatmul.mubr.bf16.gmra.mrb[0].mxu0 %v228
      %v300 = vpop.f32.mrb[0].mxu0
      %v301 = vadd.f32 0.0, %v300
      %v302 = vpop.f32.mrb[0].mxu0
      %v303 = vpop.f32.mrb[0].mxu0
      %v304 = vadd.f32 0.0, %v303
      %v305 = vpop.f32.mrb[0].mxu0
      %306 = vmatprep.mubr.bf16.mxu0 0
      %307 = vmatmul.mubr.bf16.gmra.mrb[0].mxu0 %v231
      %v308 = vpop.f32.mrb[0].mxu0
      %v309 = vadd.f32 0.0, %v308
      %v310 = vpop.f32.mrb[0].mxu0
      %v311 = vpop.f32.mrb[0].mxu0
      %v312 = vadd.f32 0.0, %v311
      %v313 = vpop.f32.mrb[0].mxu0
      %314 = vmatprep.mubr.bf16.mxu0 0
      %315 = vmatmul.mubr.bf16.gmra.mrb[0].mxu0 %v234
      %v316 = vpop.f32.mrb[0].mxu0
      %v317 = vadd.f32 0.0, %v316
      %v318 = vpop.f32.mrb[0].mxu0
      %v319 = vpop.f32.mrb[0].mxu0
      %v320 = vadd.f32 0.0, %v319
      %v321 = vpop.f32.mrb[0].mxu0
      %322 = vmatprep.mubr.bf16.mxu0 0
      %323 = vmatmul.mubr.bf16.gmra.mrb[0].mxu0 %v237
      %v324 = vpop.f32.mrb[0].mxu0
      %v325 = vadd.f32 0.0, %v324
      %v326 = vpop.f32.mrb[0].mxu0
      %v327 = vpop.f32.mrb[0].mxu0
      %v328 = vadd.f32 0.0, %v327
      %v329 = vpop.f32.mrb[0].mxu0
      %330 = vmatprep.mubr.bf16.mxu0 0
      %331 = vmatmul.mubr.bf16.gmra.mrb[0].mxu0 %v240
      %v332 = vpop.f32.mrb[0].mxu0
      %v333 = vadd.f32 0.0, %v332
      %v334 = vpop.f32.mrb[0].mxu0
      %v335 = vpop.f32.mrb[0].mxu0
      %v336 = vadd.f32 0.0, %v335
      %v337 = vpop.f32.mrb[0].mxu0
      %338 = vdwg.mxu0
      %v339 = vpack.c.bf16 %v280, %v277
      %v340 = vpack.c.bf16 %v288, %v285
      %v341 = vpack.c.bf16 %v296, %v293
      %v342 = vpack.c.bf16 %v304, %v301
      %v343 = vpack.c.bf16 %v312, %v309
      %v344 = vpack.c.bf16 %v320, %v317
      %v345 = vpack.c.bf16 %v328, %v325
      %v346 = vpack.c.bf16 %v336, %v333
      %v355 = vunpack.c.l.b16 %v339
      %v356 = vunpack.c.h.b16 %v339
      %v357 = vunpack.c.l.b16 %v340
      %v358 = vunpack.c.h.b16 %v340
      %v359 = vunpack.c.l.b16 %v341
      %v360 = vunpack.c.h.b16 %v341
      %v361 = vunpack.c.l.b16 %v342
      %v362 = vunpack.c.h.b16 %v342
      %v363 = vunpack.c.l.b16 %v343
      %v364 = vunpack.c.h.b16 %v343
      %v365 = vunpack.c.l.b16 %v344
      %v366 = vunpack.c.h.b16 %v344
      %v367 = vunpack.c.l.b16 %v345
      %v368 = vunpack.c.h.b16 %v345
      %v369 = vunpack.c.l.b16 %v346
      %v370 = vunpack.c.h.b16 %v346
      %v371 = vpack.c.b16 %v355, %v355
      %v372 = vpack.c.b16 %v356, %v356
      %v373 = vpack.c.b16 %v357, %v357
      %v374 = vpack.c.b16 %v358, %v358
      %v375 = vpack.c.b16 %v359, %v359
      %v376 = vpack.c.b16 %v360, %v360
      %v377 = vpack.c.b16 %v361, %v361
      %v378 = vpack.c.b16 %v362, %v362
      %v379 = vpack.c.b16 %v363, %v363
      %v380 = vpack.c.b16 %v364, %v364
      %v381 = vpack.c.b16 %v365, %v365
      %v382 = vpack.c.b16 %v366, %v366
      %v383 = vpack.c.b16 %v367, %v367
      %v384 = vpack.c.b16 %v368, %v368
      %v385 = vpack.c.b16 %v369, %v369
      %v386 = vpack.c.b16 %v370, %v370
      %vm403 = vcmask 257024
      %404 = vst.msk [vmem:[%s187] sm:$0xf] %vm403, %v371
      %405 = vst.msk [vmem:[%s187 + $0x4] sm:$0xf] %vm403, %v372
      %406 = vst.msk [vmem:[%s187 + $0x8] sm:$0xf] %vm403, %v373
      %407 = vst.msk [vmem:[%s187 + $0xc] sm:$0xf] %vm403, %v374
      %408 = vst.msk [vmem:[%s187 + $0x10] sm:$0xf] %vm403, %v375
      %409 = vst.msk [vmem:[%s187 + $0x14] sm:$0xf] %vm403, %v376
      %410 = vst.msk [vmem:[%s187 + $0x18] sm:$0xf] %vm403, %v377
      %411 = vst.msk [vmem:[%s187 + $0x1c] sm:$0xf] %vm403, %v378
      %412 = vst.msk [vmem:[%s187 + $0x20] sm:$0xf] %vm403, %v379
      %413 = vst.msk [vmem:[%s187 + $0x24] sm:$0xf] %vm403, %v380
      %414 = vst.msk [vmem:[%s187 + $0x28] sm:$0xf] %vm403, %v381
      %415 = vst.msk [vmem:[%s187 + $0x2c] sm:$0xf] %vm403, %v382
      %416 = vst.msk [vmem:[%s187 + $0x30] sm:$0xf] %vm403, %v383
      %417 = vst.msk [vmem:[%s187 + $0x34] sm:$0xf] %vm403, %v384
      %418 = vst.msk [vmem:[%s187 + $0x38] sm:$0xf] %vm403, %v385
      %419 = vst.msk [vmem:[%s187 + $0x3c] sm:$0xf] %vm403, %v386
      %s420 = smul.u32 16, %s18
      %p421 = scmp.lt.s32.totalorder %s17, 1
      %s422 = scalar_select %p421, %s17, 1
      %p423 = scmp.lt.s32.totalorder %s420, 31
      %s424 = scalar_select %p423, %s420, 31
      %s425 = smul.addr %s422, 32
      %s426 = sadd.s32 %s424, %s425
      %s427 = smul.addr %s426, 4
      %s428 = scalar_lea.vmem %s2, %s427
      // Predicated region
      $region29: #{tpu_custom_call.1} parent=27 // pred_check
        %p429 = pneg %p97
      $region30: #{tpu_custom_call.1} parent=27 // pred_check_branch
        %431 = sbr.rel (%p429) target = $region32
      $region31: #{tpu_custom_call.1} parent=27 // pred_region
        %s432 = smul.u32 16, %s18
      $region32: #{tpu_custom_call.1} parent=27 // pred_fallthru
        _
    $region28: #{tpu_custom_call.1} parent=5 // pred_fallthru
      _
    %p433 = scmp.le.s32.totalorder 2, %s8
    // Predicated region
    $region33: #{tpu_custom_call.1} parent=5 // pred_check
      %p434 = pneg %p433
    $region34: #{tpu_custom_call.1} parent=5 // pred_check_branch
      %436 = sbr.rel (%p434) target = $region36
    $region35: #{tpu_custom_call.1} parent=5 // pred_region
      %s437 = ssub.s32 %s8, 2
      // Predicated region
      $region37: #{tpu_custom_call.1} parent=35 // pred_check
        %p438 = pneg %p103
      $region38: #{tpu_custom_call.1} parent=35 // pred_check_branch
        %440 = sbr.rel (%p438) target = $region40
      $region39: #{tpu_custom_call.1} parent=35 // pred_region
        %s441 = smul.u32 16, %s20
        %p442 = scmp.lt.s32.totalorder %s19, 1
        %s443 = scalar_select %p442, %s19, 1
        %p444 = scmp.lt.s32.totalorder %s441, 31
        %s445 = scalar_select %p444, %s441, 31
        %s446 = smul.addr %s443, 32
        %s447 = sadd.s32 %s445, %s446
        %s448 = smul.addr %s447, 4
        %s449 = scalar_lea.vmem %s2, %s448
      $region40: #{tpu_custom_call.1} parent=35 // pred_fallthru
        _
    $region36: #{tpu_custom_call.1} parent=5 // pred_fallthru
      _
  $region6: #{tpu_custom_call.1} parent=0 // loop_footer
    %s12 = sadd.s32 1, %s8
  $region7: #{tpu_custom_call.1} parent=0 // loop_footer_branch
    %7 = sbr.rel target = $region3
  $region8: #{tpu_custom_call.1} parent=0 // loop_exit
    _

</llo_original>
